<compile_context>
chip_gen: v6e
topology: v6e:2x2x1
jax: 0.10.0
libtpu: 0.0.40
codegen_flags: <defaults>
</compile_context>

<pallas_src>
import functools

import jax
import jax.numpy as jnp
import numpy as np
from jax.experimental import pallas as pl
from jax.experimental.pallas import tpu as pltpu

_LANES = 128


def _round_up(x, m):
    return ((x + m - 1) // m) * m


def _focal_loss_kernel(logits_ref, target_ref, out_ref, *,
                       alpha, gamma, n_rows, block_n):
    i = pl.program_id(0)
    rows_remaining = n_rows - i * block_n

    logits = logits_ref[...]                               # (block_n, C) native dtype
    target = target_ref[...]                               # (block_n, 1) int32

    # Row max and one-hot target-logit gather on the native dtype (both exact
    # for bf16/f32); avoids materializing a full f32 copy of the tile.
    m = jnp.max(logits, axis=-1, keepdims=True)             # (block_n, 1)
    col_ids = jax.lax.broadcasted_iota(jnp.int32, (1, logits.shape[-1]), 1)
    onehot = col_ids == target                               # (block_n, C) via broadcast
    tgt_logit = jnp.sum(jnp.where(onehot, logits, 0), axis=-1, keepdims=True)

    # f32 only where numerics need it: shifted exp + per-row scalars.
    m_f32 = m.astype(jnp.float32)
    shifted = logits.astype(jnp.float32) - m_f32             # (block_n, C) f32
    sumexp = jnp.sum(jnp.exp(shifted), axis=-1, keepdims=True)

    ce = jnp.log(sumexp) + m_f32 - tgt_logit.astype(jnp.float32)  # (block_n, 1)
    pt = jnp.exp(-ce)                                        # per-row EUP exp (cheap)

    one_minus_pt = jnp.maximum(1.0 - pt, 0.0)                # clamp: pow NaN guard
    if float(gamma) == int(gamma) and gamma >= 0:
        w = one_minus_pt ** int(gamma)                        # integer_pow -> muls
    else:
        w = jnp.power(one_minus_pt, jnp.float32(gamma))
    focal = alpha * w * ce                                    # (block_n, 1)

    # Mask garbage rows of the padded last tile (where, not mul: NaN-safe).
    row_ids = jax.lax.broadcasted_iota(jnp.int32, focal.shape, 0)
    focal = jnp.where(row_ids < rows_remaining, focal, 0.0)

    # Lane-dense per-block partial sum; wrapper finishes the mean.
    out_ref[...] = jnp.full((1, _LANES), jnp.sum(focal), dtype=jnp.float32)


def focal_loss(logits, target, alpha=1.0, gamma=2.0, block_n=None):
    """logits: (N, C) float32/bfloat16, target: (N,) int class ids -> scalar."""
    n, c = logits.shape
    target2d = target.astype(jnp.int32).reshape(n, 1)

    itemsize = jnp.dtype(logits.dtype).itemsize
    sublane = max(8, 32 // itemsize)        # 8 for f32, 16 for bf16, 32 for int8

    # Per-row VMEM cost:
    #   2 x input buffers (double-buffered logits tile)
    #   ~2 x full-tile f32 intermediates for the shifted-exp path
    #   2 x lane-padded (block_n, 1) int32 target buffers (128 lanes -> 512 B/row)
    row_cost = 2 * c * itemsize + 2 * c * 4 + 2 * _LANES * 4

    if block_n is None:
        # ~24 MiB working-set budget: fits v7x's 32 MiB scoped VMEM default
        # (64 MiB physical) and trivially fits v5e/v6e's 128 MiB.
        budget = 24 << 20
        block_n = max(sublane, budget // row_cost)
    block_n = _round_up(max(sublane, min(block_n, _round_up(n, sublane))), sublane)
    num_blocks = pl.cdiv(n, block_n)

    # v7x: prefer >=2 and even blocks so the "parallel" axis shards onto both
    # TensorCores (each has its own ~3.2 TB/s HBM path).
    if num_blocks > 1 and num_blocks % 2 == 1:
        block_n = _round_up(pl.cdiv(n, num_blocks + 1), sublane)
        num_blocks = pl.cdiv(n, block_n)

    kernel = functools.partial(
        _focal_loss_kernel,
        alpha=float(alpha), gamma=float(gamma), n_rows=n, block_n=block_n,
    )

    # VMEM limit from the actual working set (+ slack), capped at 32 MiB so it
    # never claims a whole v7x TensorCore's physical VMEM.
    working = block_n * row_cost + 2 * _LANES * 4
    vmem_limit = int(min(max(working + (4 << 20), 16 << 20), 32 << 20))

    bytes_in = n * c * itemsize + n * 4
    cost = pl.CostEstimate(
        flops=6 * n * c,
        transcendentals=n * c + 2 * n,
        bytes_accessed=bytes_in + num_blocks * _LANES * 4,
    )

    partial = pl.pallas_call(
        kernel,
        out_shape=jax.ShapeDtypeStruct((num_blocks, _LANES), jnp.float32),
        grid=(num_blocks,),
        in_specs=[
            pl.BlockSpec((block_n, c), lambda i: (i, 0)),   # logits row tile
            pl.BlockSpec((block_n, 1), lambda i: (i, 0)),   # target row tile
        ],
        out_specs=pl.BlockSpec((1, _LANES), lambda i: (i, 0)),
        compiler_params=pltpu.CompilerParams(
            dimension_semantics=("parallel",),   # independent blocks -> both TCs on v7x
            vmem_limit_bytes=vmem_limit,
        ),
        cost_estimate=cost,
    )(logits, target2d)

    # reduction='mean'  # TODO(synk): 'sum'/'none' reductions not wired through wrapper.
    return jnp.sum(partial[:, 0]) / jnp.float32(n)


def _focal_loss_ref(logits, target, alpha=1.0, gamma=2.0):
    # Pure-JAX reference mirroring torch semantics.
    logits = logits.astype(jnp.float32)
    lse = jax.nn.logsumexp(logits, axis=-1)
    tgt_logit = jnp.take_along_axis(logits, target[:, None], axis=-1)[:, 0]
    ce = lse - tgt_logit
    pt = jnp.exp(-ce)
    return jnp.mean(alpha * (1.0 - pt) ** gamma * ce)


if __name__ == "__main__":
    key = jax.random.PRNGKey(0)

    # Case 1: small f32 problem, single block.
    k1, k2 = jax.random.split(key)
    N, C = 8, 32
    logits = jax.random.normal(k1, (N, C), dtype=jnp.float32)
    target = jax.random.randint(k2, (N,), 0, C, dtype=jnp.int32)
    loss = jax.block_until_ready(focal_loss(logits, target, alpha=1.0, gamma=2.0))
    ref = _focal_loss_ref(logits, target, alpha=1.0, gamma=2.0)
    np.testing.assert_allclose(np.asarray(loss), np.asarray(ref),
                               rtol=1e-5, atol=1e-5)

    # Case 2: bf16 logits, multi-block ragged grid (exercises tiling + masking).
    k3, k4 = jax.random.split(k2)
    N2, C2 = 200, 128
    logits2 = jax.random.normal(k3, (N2, C2), dtype=jnp.float32).astype(jnp.bfloat16)
    target2 = jax.random.randint(k4, (N2,), 0, C2, dtype=jnp.int32)
    loss2 = jax.block_until_ready(
        focal_loss(logits2, target2, alpha=0.5, gamma=2.0, block_n=64))
    ref2 = _focal_loss_ref(logits2, target2, alpha=0.5, gamma=2.0)
    np.testing.assert_allclose(np.asarray(loss2), np.asarray(ref2),
                               rtol=1e-4, atol=1e-5)

    # Case 3: auto tile sizing (large block_n path) on a small-C f32 problem.
    k5, k6 = jax.random.split(k4)
    N3, C3 = 300, 16
    logits3 = jax.random.normal(k5, (N3, C3), dtype=jnp.float32)
    target3 = jax.random.randint(k6, (N3,), 0, C3, dtype=jnp.int32)
    loss3 = jax.block_until_ready(focal_loss(logits3, target3, alpha=1.0, gamma=2.0))
    ref3 = _focal_loss_ref(logits3, target3, alpha=1.0, gamma=2.0)
    np.testing.assert_allclose(np.asarray(loss3), np.asarray(ref3),
                               rtol=1e-5, atol=1e-5)

    print("KERNEL_OK")
</pallas_src>

<mosaic_0001>
module attributes {stable_mosaic.version = 11 : i64} {
  func.func @_focal_loss_kernel(%arg0: i32, %arg1: memref<8x32xf32, #tpu.memory_space<vmem>>, %arg2: memref<8x1xi32, #tpu.memory_space<vmem>>, %arg3: memref<1x128xf32, #tpu.memory_space<vmem>>) attributes {dimension_semantics = [#tpu.dimension_semantics<parallel>], iteration_bounds = array<i64: 1>, scalar_prefetch = 0 : i64, scratch_operands = 0 : i64, tpu.core_type = #tpu.core_type<tc>, window_params = [{transform_indices = @transform_0, window_bounds = array<i64: 8, 32>}, {transform_indices = @transform_1, window_bounds = array<i64: 8, 1>}, {transform_indices = @transform_2, window_bounds = array<i64: 1, 128>}]} {
    %c8_i32 = arith.constant 8 : i32
    %0 = arith.muli %arg0, %c8_i32 : i32
    %c8_i32_0 = arith.constant 8 : i32
    %1 = arith.subi %c8_i32_0, %0 : i32
    %c0 = arith.constant 0 : index
    %c0_1 = arith.constant 0 : index
    %2 = vector.load %arg1[%c0, %c0_1] : memref<8x32xf32, #tpu.memory_space<vmem>>, vector<8x32xf32>
    %c0_2 = arith.constant 0 : index
    %c0_3 = arith.constant 0 : index
    %3 = vector.load %arg2[%c0_2, %c0_3] : memref<8x1xi32, #tpu.memory_space<vmem>>, vector<8x1xi32>
    %cst = arith.constant dense<0xFF800000> : vector<8xf32>
    %4 = vector.multi_reduction <maximumf>, %2, %cst [1] : vector<8x32xf32> to vector<8xf32>
    %5 = vector.shape_cast %4 : vector<8xf32> to vector<8x1xf32>
    %6 = tpu.iota {dimensions = array<i32: 1>} : vector<1x32xi32>
    %7 = vector.broadcast %6 : vector<1x32xi32> to vector<8x32xi32>
    %8 = vector.broadcast %3 : vector<8x1xi32> to vector<8x32xi32>
    %9 = arith.cmpi eq, %7, %8 : vector<8x32xi32>
    %c0_i32 = arith.constant 0 : i32
    %10 = arith.sitofp %c0_i32 : i32 to f32
    %11 = vector.broadcast %10 : f32 to vector<8x32xf32>
    %12 = arith.select %9, %2, %11 : vector<8x32xi1>, vector<8x32xf32>
    %cst_4 = arith.constant dense<0.000000e+00> : vector<8xf32>
    %13 = vector.multi_reduction <add>, %12, %cst_4 [1] : vector<8x32xf32> to vector<8xf32>
    %14 = vector.shape_cast %13 : vector<8xf32> to vector<8x1xf32>
    %15 = vector.broadcast %5 : vector<8x1xf32> to vector<8x32xf32>
    %16 = arith.subf %2, %15 : vector<8x32xf32>
    %17 = math.exp %16 : vector<8x32xf32>
    %cst_5 = arith.constant dense<0.000000e+00> : vector<8xf32>
    %18 = vector.multi_reduction <add>, %17, %cst_5 [1] : vector<8x32xf32> to vector<8xf32>
    %19 = vector.shape_cast %18 : vector<8xf32> to vector<8x1xf32>
    %20 = math.log %19 : vector<8x1xf32>
    %21 = arith.addf %20, %5 : vector<8x1xf32>
    %22 = arith.subf %21, %14 : vector<8x1xf32>
    %cst_6 = arith.constant 0.000000e+00 : f32
    %23 = vector.broadcast %cst_6 : f32 to vector<8x1xf32>
    %24 = arith.subf %23, %22 : vector<8x1xf32>
    %25 = math.exp %24 : vector<8x1xf32>
    %cst_7 = arith.constant 1.000000e+00 : f32
    %26 = vector.broadcast %cst_7 : f32 to vector<8x1xf32>
    %27 = arith.subf %26, %25 : vector<8x1xf32>
    %cst_8 = arith.constant 0.000000e+00 : f32
    %28 = vector.broadcast %cst_8 : f32 to vector<8x1xf32>
    %29 = arith.maximumf %27, %28 : vector<8x1xf32>
    %30 = arith.mulf %29, %29 : vector<8x1xf32>
    %cst_9 = arith.constant 1.000000e+00 : f32
    %31 = vector.broadcast %cst_9 : f32 to vector<8x1xf32>
    %32 = arith.mulf %31, %30 : vector<8x1xf32>
    %33 = arith.mulf %32, %22 : vector<8x1xf32>
    %34 = tpu.iota {dimensions = array<i32: 0>} : vector<8x1xi32>
    %35 = vector.broadcast %1 : i32 to vector<8x1xi32>
    %36 = arith.cmpi slt, %34, %35 : vector<8x1xi32>
    %cst_10 = arith.constant 0.000000e+00 : f32
    %37 = vector.broadcast %cst_10 : f32 to vector<8x1xf32>
    %38 = arith.select %36, %33, %37 : vector<8x1xi1>, vector<8x1xf32>
    %39 = vector.shape_cast %38 : vector<8x1xf32> to vector<1x8x1xf32>
    %cst_11 = arith.constant dense<0.000000e+00> : vector<1xf32>
    %40 = vector.multi_reduction <add>, %39, %cst_11 [1, 2] : vector<1x8x1xf32> to vector<1xf32>
    %41 = vector.shape_cast %40 : vector<1xf32> to vector<1x1x1xf32>
    %42 = vector.extract %41[0, 0, 0] : f32 from vector<1x1x1xf32>
    %43 = vector.broadcast %42 : f32 to vector<1x128xf32>
    %c0_12 = arith.constant 0 : index
    %c0_13 = arith.constant 0 : index
    %44 = vector.load %arg3[%c0_12, %c0_13] : memref<1x128xf32, #tpu.memory_space<vmem>>, vector<1x128xf32>
    tpu.vector_store %arg3[%c0_12, %c0_13], %43 {strides = array<i32>} : memref<1x128xf32, #tpu.memory_space<vmem>>, vector<1x128xf32>,
    return
  }
  func.func @transform_0(%arg0: i32) -> (i32, i32) {
    %c0_i32 = arith.constant 0 : i32
    %c0_i32_0 = arith.constant 0 : i32
    return %arg0, %c0_i32 : i32, i32
  }
  func.func @transform_1(%arg0: i32) -> (i32, i32) {
    %c0_i32 = arith.constant 0 : i32
    %c0_i32_0 = arith.constant 0 : i32
    return %arg0, %c0_i32 : i32, i32
  }
  func.func @transform_2(%arg0: i32) -> (i32, i32) {
    %c0_i32 = arith.constant 0 : i32
    %c0_i32_0 = arith.constant 0 : i32
    return %arg0, %c0_i32 : i32, i32
  }
}

</mosaic_0001>

<llo_original>
// kernel: tpu_custom_call.1
$region0: #{tpu_custom_call.1}
  #allocation0 [shape = 'u32[]', space=smem, size = 0x4, offset = 0x4, fixed_abs, tag = 'smem constant byte address 0x4 - core index']
  #allocation1 [shape = 'u32[144,128]{1,0:T(1,128)}', space=vmem, size = 0x12000, scoped, tag = 'internal scratch']
  %s0 = inlined_call_operand.vmem [shape: f32[8,32], index: 0, kind: input, shape index: {}]
  %s1 = inlined_call_operand.vmem [shape: s32[8,1], index: 1, kind: input, shape index: {}]
  %s2 = inlined_call_operand.hbm [shape: f32[1,128], index: 2, kind: output, shape index: {}]
  %s3 = sld [smem:[#allocation0]]
  $region18: #{tpu_custom_call.1} parent=0
    _
  %s5 = ssub.s32 1, %s3
  %s6 = scalar_select 0, %s5, %s3
  $region1: #{tpu_custom_call.1} parent=0
    #allocation2 [shape = 'u8[512]{0}', space=vmem, size = 0x400, scoped, tag = 'output window, operand 0, single buffered']
    #allocation3 [shape = 's32[1]{0}', space=sflag, size = 0x4, scoped, tag = 'scoped memory for tpu_custom_call.1']
    %7 = vsyncpa [#allocation3], 0
    // Predicated region
    $region2: #{tpu_custom_call.1} parent=1 // pred_check
      _
    $region3: #{tpu_custom_call.1} parent=1 // pred_check_branch
      %9 = sbr.rel (0) target = $region5
    $region4: #{tpu_custom_call.1} parent=1 // pred_region
      _
    $region5: #{tpu_custom_call.1} parent=1 // pred_fallthru
      _
    // Predicated region
    $region6: #{tpu_custom_call.1} parent=1 // pred_check
      _
    $region7: #{tpu_custom_call.1} parent=1 // pred_check_branch
      %11 = sbr.rel (0) target = $region9
    $region8: #{tpu_custom_call.1} parent=1 // pred_region
      _
    $region9: #{tpu_custom_call.1} parent=1 // pred_fallthru
      _
    %s12 = smul.u32 0, 8
    %s13 = ssub.s32 8, %s12
    %v14 = vld [vmem:[%s0] sm:$0xff]
    %v15 = vld [vmem:[%s1] sm:$0xff]
    %vm16 = vcmask 261120
    %v17 = vsel %vm16, %v14, -inf
    %18 = vmax.xlane.f32.xlu0 %v17
    %v19 = vpop.xlane.xlu0 %18
    %v20 = vlaneseq
    %v21 = vand.u32 %v20, 127
    %22 = vset.pattern.permute.xlu0 0
    %23 = vperm.xlu0 %22, %v15
    %v24 = vpop.permute.xlu0 %23
    %vm25 = vcmp.eq.s32.totalorder %v21, %v24
    %v26 = vsel %vm25, %v14, 0.0
    %v27 = vsel %vm16, %v26, 0.0
    %28 = vadd.xlane.f32.xlu0 %v27
    %v29 = vpop.xlane.xlu0 %28
    %v30 = vsub.f32 %v14, %v19
    %v31 = vmul.f32 %v30, 1.442695
    %v32 = vpow.pop %v31
    %v33 = vsel %vm16, %v32, 0.0
    %34 = vadd.xlane.f32.xlu0 %v33
    %v35 = vpop.xlane.xlu0 %34
    %v36 = vlog2.pop %v35
    %v37 = vmul.f32 %v36, 0.6931472
    %v38 = vadd.f32 %v37, %v19
    %v39 = vsub.f32 %v38, %v29
    %v40 = vsub.f32 0.0, %v39
    %v41 = vmul.f32 %v40, 1.442695
    %v42 = vpow.pop %v41
    %v43 = vsub.f32 1.0, %v42
    %v44 = vmax.f32 %v43, 0.0
    %v45 = vmul.f32 %v44, %v44
    %v46 = vmul.f32 %v45, %v39
    %v47 = vlaneseq
    %v48 = vshrl.u32 %v47, 7
    %v49 = vstv %s13
    %vm50 = vcmp.lt.s32.totalorder %v48, %v49
    %v51 = vsel %vm50, %v46, 0.0
    %vm52 = vcmask 7168
    %v53 = vsel %vm52, %v51, 0.0
    %54 = vadd.xlane.f32.xlu0 %v53
    %v55 = vpop.xlane.xlu0 %54
    %v56 = vrot.slane %v55, 4
    %v57 = vadd.f32 %v55, %v56
    %v58 = vrot.slane %v57, 2
    %v59 = vadd.f32 %v57, %v58
    %v60 = vrot.slane %v59, 1
    %v61 = vadd.f32 %v59, %v60
    %s62 = vtos %v61
    %v63 = vstv %s62
    %64 = vst [vmem:[#allocation2] sm:$0x1] %v63
    // Predicated region
    $region10: #{tpu_custom_call.1} parent=1 // pred_check
      _
    $region11: #{tpu_custom_call.1} parent=1 // pred_check_branch
      %66 = sbr.rel (0) target = $region13
    $region12: #{tpu_custom_call.1} parent=1 // pred_region
      %s68 = ssub.s32 16, 16
      %69 = vsyncadd [#allocation3], %s68
      %s71 = sshll.u32 [#allocation2], 4
      %s72 = int_to_ptr.vmem [resolvable:$true] %s71
      %74 = dma.vmem_to_hbm [thread:$0]  %s72, 16, %s2, [#allocation3]
    $region13: #{tpu_custom_call.1} parent=1 // pred_fallthru
      _
    // Predicated region
    $region14: #{tpu_custom_call.1} parent=1 // pred_check
      _
    $region15: #{tpu_custom_call.1} parent=1 // pred_check_branch
      %76 = sbr.rel (0) target = $region17
    $region16: #{tpu_custom_call.1} parent=1 // pred_region
      %77 = dma.done [#allocation3], 16
    $region17: #{tpu_custom_call.1} parent=1 // pred_fallthru
      _
    %78 = vsyncpa [#allocation3], 1

</llo_original>
